<compile_context>
chip_gen: v7x
topology: tpu7x:2x2x1
jax: 0.10.0
libtpu: 0.0.40
codegen_flags: <defaults>
</compile_context>

<pallas_src>
import functools

import jax
import jax.numpy as jnp
from jax.experimental import pallas as pl
from jax.experimental.pallas import tpu as pltpu

_PACK = 8  # batch rows folded into the lane axis (8 * out_dim(16) = 128 lanes)


def _round_up(x, m):
    return (x + m - 1) // m * m


def _mlp_kernel(x_ref, w1_ref, b1_ref, w2_ref, b2_ref, w3_ref, b3_ref, o_ref):
    # x arrives in f32 straight from HBM; cast to bf16 here (VPU filler hidden
    # under DMA slack) so x only crosses HBM once at 4 B/elem.
    xb = x_ref[...].astype(jnp.bfloat16)
    # fc1 + ReLU   (dropout d1 = identity in eval mode)
    h1 = jnp.dot(xb, w1_ref[...], preferred_element_type=jnp.float32)
    h1 = jnp.maximum(h1 + b1_ref[...], 0.0)
    # fc2 + ReLU   (dropout d2 = identity in eval mode)
    h2 = jnp.dot(h1.astype(jnp.bfloat16), w2_ref[...],
                 preferred_element_type=jnp.float32)
    h2 = jnp.maximum(h2 + b2_ref[...], 0.0)
    # fc3 + sigmoid (elementwise kept in f32: required on v5e, slack elsewhere)
    z = jnp.dot(h2.astype(jnp.bfloat16), w3_ref[...],
                preferred_element_type=jnp.float32)
    o_ref[...] = jax.nn.sigmoid(z + b3_ref[...])


@functools.partial(jax.jit, static_argnames=("block_b",))
def mlp_forward(x, w1, b1, w2, b2, w3, b3, *, block_b=8192):
    """Pallas TPU forward pass.

    x:  [B, n_input]  float32
    w1: [n_input, n_hidden],  b1: [1, n_hidden]
    w2: [n_hidden, n_hidden], b2: [1, n_hidden]
    w3: [n_hidden, agent_num*role_num], b3: [1, agent_num*role_num]
    returns [B, agent_num*role_num] float32
    """
    assert block_b % (8 * _PACK) == 0
    B, n_in = x.shape
    n_h = w1.shape[1]
    out_dim = w3.shape[1]

    # Pad only to a multiple of _PACK rows (<= 7 rows, and only when ragged);
    # the ragged last grid block is handled by Pallas' masked partial blocks,
    # so no full-size padded copy of x is ever materialized for large batches.
    b8 = _round_up(B, _PACK)
    if b8 != B:
        x = jnp.pad(x, ((0, b8 - B), (0, 0)))
    bp = b8 // _PACK

    # Free (contiguous row-major) reshape: fold groups of _PACK batch rows into
    # the lane axis -> lane-dense loads and a 128-lane-dense output slab.
    xp = x.reshape(bp, _PACK * n_in)

    # Block-diagonal weight expansion (tiny: <=256x256) so every packed row
    # group is an independent copy of the original layer -> identical math.
    def expand(w, b):
        wbd = jnp.kron(jnp.eye(_PACK, dtype=jnp.bfloat16), w.astype(jnp.bfloat16))
        return wbd, jnp.tile(b, (1, _PACK))

    w1p, b1p = expand(w1, b1)
    w2p, b2p = expand(w2, b2)
    w3p, b3p = expand(w3, b3)

    # Batch tile, in packed rows. Big tiles amortize the ~0.35 us/grid-step
    # overhead; cap so the grid has >=2 parallel steps when possible so both
    # v7x TensorCores get work (no-op on v5e/v6e).
    if bp <= 8:
        tbp = bp                       # single block == full array dims
    else:
        tbp = max(8, min(block_b // _PACK, _round_up(pl.cdiv(bp, 2), 8)))
    grid = (pl.cdiv(bp, tbp),)

    in_w, out_w = _PACK * n_in, _PACK * out_dim
    hid_w = _PACK * n_h

    def batch_spec(width):
        return pl.BlockSpec((tbp, width), lambda i: (i, 0))

    def const_spec(shape):
        # Same block every grid step -> DMA'd once, stays VMEM-resident.
        return pl.BlockSpec(shape, lambda i: (0, 0))

    flops = 2 * bp * (in_w * hid_w + hid_w * hid_w + hid_w * out_w)
    bytes_accessed = (
        bp * in_w * 4                                   # x (f32)
        + bp * out_w * 4                                # output (f32)
        + (in_w * hid_w + hid_w * hid_w + hid_w * out_w) * 2   # weights (bf16)
        + (2 * hid_w + out_w) * 4                       # biases (f32)
    )

    out = pl.pallas_call(
        _mlp_kernel,
        out_shape=jax.ShapeDtypeStruct((bp, out_w), jnp.float32),
        grid=grid,
        in_specs=[
            batch_spec(in_w),
            const_spec((in_w, hid_w)),
            const_spec((1, hid_w)),
            const_spec((hid_w, hid_w)),
            const_spec((1, hid_w)),
            const_spec((hid_w, out_w)),
            const_spec((1, out_w)),
        ],
        out_specs=batch_spec(out_w),
        compiler_params=pltpu.CompilerParams(
            dimension_semantics=("parallel",)),
        cost_estimate=pl.CostEstimate(
            flops=flops,
            transcendentals=bp * out_w,
            bytes_accessed=bytes_accessed),
    )(xp, w1p, b1p, w2p, b2p, w3p, b3p)

    # Free reshape back to row-per-sample layout; drop pad rows.
    return out.reshape(b8, out_dim)[:B]


def init_params(key, n_input, n_hidden, agent_num, role_num):
    """Deterministic, PyTorch-Linear-style uniform init (1/sqrt(fan_in) bound).

    Weights are stored as [in_features, out_features] (transpose of PyTorch's
    [out, in]) so each layer is a plain x @ W + b on the MXU.
    """
    out_dim = agent_num * role_num
    ks = jax.random.split(key, 6)

    def lin(kw, kb, fan_in, fan_out):
        bound = 1.0 / jnp.sqrt(float(fan_in))
        w = jax.random.uniform(kw, (fan_in, fan_out), jnp.float32, -bound, bound)
        b = jax.random.uniform(kb, (1, fan_out), jnp.float32, -bound, bound)
        return w, b

    w1, b1 = lin(ks[0], ks[1], n_input, n_hidden)
    w2, b2 = lin(ks[2], ks[3], n_hidden, n_hidden)
    w3, b3 = lin(ks[4], ks[5], n_hidden, out_dim)
    return w1, b1, w2, b2, w3, b3


if __name__ == "__main__":
    # Shapes consistent with the module's forward:
    # n_input=32, n_hidden=32, agent_num=4, role_num=4 -> out_dim=16
    n_input, n_hidden, agent_num, role_num = 32, 32, 4, 4
    out_dim = agent_num * role_num

    key = jax.random.PRNGKey(0)
    kx, kp = jax.random.split(key)
    params = init_params(kp, n_input, n_hidden, agent_num, role_num)
    w1, b1, w2, b2, w3, b3 = params

    def reference(xv):
        h1 = jnp.maximum(xv @ w1 + b1, 0.0)
        h2 = jnp.maximum(h1 @ w2 + b2, 0.0)
        return jax.nn.sigmoid(h2 @ w3 + b3)

    # Case 1: multi-step grid with a ragged last block (200 rows -> 25 packed
    # rows, tile of 16 packed rows -> grid of 2, last block partial).
    B1 = 200
    x1 = jax.random.normal(kx, (B1, n_input), dtype=jnp.float32)
    out1 = jax.block_until_ready(mlp_forward(x1, *params, block_b=512))
    ref1 = reference(x1)
    assert out1.shape == (B1, out_dim)
    assert jnp.allclose(out1, ref1, atol=2e-2), float(jnp.max(jnp.abs(out1 - ref1)))

    # Case 2: tiny batch, single block (block == full packed array).
    B2 = 8
    x2 = jax.random.normal(jax.random.PRNGKey(1), (B2, n_input), dtype=jnp.float32)
    out2 = jax.block_until_ready(mlp_forward(x2, *params))
    ref2 = reference(x2)
    assert out2.shape == (B2, out_dim)
    assert jnp.allclose(out2, ref2, atol=2e-2), float(jnp.max(jnp.abs(out2 - ref2)))

    # Case 3: batch not a multiple of 8 -> exercises the small remainder pad.
    B3 = 13
    x3 = jax.random.normal(jax.random.PRNGKey(2), (B3, n_input), dtype=jnp.float32)
    out3 = jax.block_until_ready(mlp_forward(x3, *params))
    ref3 = reference(x3)
    assert out3.shape == (B3, out_dim)
    assert jnp.allclose(out3, ref3, atol=2e-2), float(jnp.max(jnp.abs(out3 - ref3)))

    print("KERNEL_OK")
</pallas_src>

<mosaic_0001>
module attributes {stable_mosaic.version = 11 : i64} {
  func.func @_mlp_kernel(%arg0: i32, %arg1: memref<16x256xf32, #tpu.memory_space<vmem>>, %arg2: memref<256x256xbf16, #tpu.memory_space<vmem>>, %arg3: memref<1x256xf32, #tpu.memory_space<vmem>>, %arg4: memref<256x256xbf16, #tpu.memory_space<vmem>>, %arg5: memref<1x256xf32, #tpu.memory_space<vmem>>, %arg6: memref<256x128xbf16, #tpu.memory_space<vmem>>, %arg7: memref<1x128xf32, #tpu.memory_space<vmem>>, %arg8: memref<16x128xf32, #tpu.memory_space<vmem>>) attributes {dimension_semantics = [#tpu.dimension_semantics<parallel>], iteration_bounds = array<i64: 2>, scalar_prefetch = 0 : i64, scratch_operands = 0 : i64, tpu.core_type = #tpu.core_type<tc>, window_params = [{transform_indices = @transform_0, window_bounds = array<i64: 16, 256>}, {pipeline_mode = #tpu.pipeline_mode<synchronous>, transform_indices = @transform_1, window_bounds = array<i64: 256, 256>}, {pipeline_mode = #tpu.pipeline_mode<synchronous>, transform_indices = @transform_2, window_bounds = array<i64: 1, 256>}, {pipeline_mode = #tpu.pipeline_mode<synchronous>, transform_indices = @transform_3, window_bounds = array<i64: 256, 256>}, {pipeline_mode = #tpu.pipeline_mode<synchronous>, transform_indices = @transform_4, window_bounds = array<i64: 1, 256>}, {pipeline_mode = #tpu.pipeline_mode<synchronous>, transform_indices = @transform_5, window_bounds = array<i64: 256, 128>}, {pipeline_mode = #tpu.pipeline_mode<synchronous>, transform_indices = @transform_6, window_bounds = array<i64: 1, 128>}, {transform_indices = @transform_7, window_bounds = array<i64: 16, 128>}]} {
    %c0 = arith.constant 0 : index
    %c0_0 = arith.constant 0 : index
    %0 = vector.load %arg1[%c0, %c0_0] : memref<16x256xf32, #tpu.memory_space<vmem>>, vector<16x256xf32>
    %1 = arith.truncf %0 : vector<16x256xf32> to vector<16x256xbf16>
    %c0_1 = arith.constant 0 : index
    %c0_2 = arith.constant 0 : index
    %2 = vector.load %arg2[%c0_1, %c0_2] : memref<256x256xbf16, #tpu.memory_space<vmem>>, vector<256x256xbf16>
    %cst = arith.constant dense<0.000000e+00> : vector<16x256xf32>
    %3 = tpu.matmul %1, %2, %cst {dimension_numbers = #tpu.dot_dimension_numbers<[1], [0], [0], [1], [0, 0, 1, 1], [], []>} : vector<16x256xbf16>, vector<256x256xbf16>, vector<16x256xf32> -> vector<16x256xf32>
    %c0_3 = arith.constant 0 : index
    %c0_4 = arith.constant 0 : index
    %4 = vector.load %arg3[%c0_3, %c0_4] : memref<1x256xf32, #tpu.memory_space<vmem>>, vector<1x256xf32>
    %5 = vector.broadcast %4 : vector<1x256xf32> to vector<16x256xf32>
    %6 = arith.addf %3, %5 : vector<16x256xf32>
    %cst_5 = arith.constant 0.000000e+00 : f32
    %7 = vector.broadcast %cst_5 : f32 to vector<16x256xf32>
    %8 = arith.maximumf %6, %7 : vector<16x256xf32>
    %9 = arith.truncf %8 : vector<16x256xf32> to vector<16x256xbf16>
    %c0_6 = arith.constant 0 : index
    %c0_7 = arith.constant 0 : index
    %10 = vector.load %arg4[%c0_6, %c0_7] : memref<256x256xbf16, #tpu.memory_space<vmem>>, vector<256x256xbf16>
    %cst_8 = arith.constant dense<0.000000e+00> : vector<16x256xf32>
    %11 = tpu.matmul %9, %10, %cst_8 {dimension_numbers = #tpu.dot_dimension_numbers<[1], [0], [0], [1], [0, 0, 1, 1], [], []>} : vector<16x256xbf16>, vector<256x256xbf16>, vector<16x256xf32> -> vector<16x256xf32>
    %c0_9 = arith.constant 0 : index
    %c0_10 = arith.constant 0 : index
    %12 = vector.load %arg5[%c0_9, %c0_10] : memref<1x256xf32, #tpu.memory_space<vmem>>, vector<1x256xf32>
    %13 = vector.broadcast %12 : vector<1x256xf32> to vector<16x256xf32>
    %14 = arith.addf %11, %13 : vector<16x256xf32>
    %cst_11 = arith.constant 0.000000e+00 : f32
    %15 = vector.broadcast %cst_11 : f32 to vector<16x256xf32>
    %16 = arith.maximumf %14, %15 : vector<16x256xf32>
    %17 = arith.truncf %16 : vector<16x256xf32> to vector<16x256xbf16>
    %c0_12 = arith.constant 0 : index
    %c0_13 = arith.constant 0 : index
    %18 = vector.load %arg6[%c0_12, %c0_13] : memref<256x128xbf16, #tpu.memory_space<vmem>>, vector<256x128xbf16>
    %cst_14 = arith.constant dense<0.000000e+00> : vector<16x128xf32>
    %19 = tpu.matmul %17, %18, %cst_14 {dimension_numbers = #tpu.dot_dimension_numbers<[1], [0], [0], [1], [0, 0, 1, 1], [], []>} : vector<16x256xbf16>, vector<256x128xbf16>, vector<16x128xf32> -> vector<16x128xf32>
    %c0_15 = arith.constant 0 : index
    %c0_16 = arith.constant 0 : index
    %20 = vector.load %arg7[%c0_15, %c0_16] : memref<1x128xf32, #tpu.memory_space<vmem>>, vector<1x128xf32>
    %21 = vector.broadcast %20 : vector<1x128xf32> to vector<16x128xf32>
    %22 = arith.addf %19, %21 : vector<16x128xf32>
    %23 = arith.negf %22 : vector<16x128xf32>
    %24 = math.exp %23 : vector<16x128xf32>
    %cst_17 = arith.constant 1.000000e+00 : f32
    %25 = vector.broadcast %cst_17 : f32 to vector<16x128xf32>
    %26 = arith.addf %25, %24 : vector<16x128xf32>
    %27 = arith.divf %25, %26 : vector<16x128xf32>
    %c0_18 = arith.constant 0 : index
    %c0_19 = arith.constant 0 : index
    %28 = vector.load %arg8[%c0_18, %c0_19] : memref<16x128xf32, #tpu.memory_space<vmem>>, vector<16x128xf32>
    tpu.vector_store %arg8[%c0_18, %c0_19], %27 {strides = array<i32>} : memref<16x128xf32, #tpu.memory_space<vmem>>, vector<16x128xf32>,
    return
  }
  func.func @transform_0(%arg0: i32) -> (i32, i32) {
    %c0_i32 = arith.constant 0 : i32
    %c0_i32_0 = arith.constant 0 : i32
    return %arg0, %c0_i32 : i32, i32
  }
  func.func @transform_1(%arg0: i32) -> (i32, i32) {
    %c0_i32 = arith.constant 0 : i32
    %c0_i32_0 = arith.constant 0 : i32
    %c0_i32_1 = arith.constant 0 : i32
    return %c0_i32, %c0_i32_0 : i32, i32
  }
  func.func @transform_2(%arg0: i32) -> (i32, i32) {
    %c0_i32 = arith.constant 0 : i32
    %c0_i32_0 = arith.constant 0 : i32
    %c0_i32_1 = arith.constant 0 : i32
    return %c0_i32, %c0_i32_0 : i32, i32
  }
  func.func @transform_3(%arg0: i32) -> (i32, i32) {
    %c0_i32 = arith.constant 0 : i32
    %c0_i32_0 = arith.constant 0 : i32
    %c0_i32_1 = arith.constant 0 : i32
    return %c0_i32, %c0_i32_0 : i32, i32
  }
  func.func @transform_4(%arg0: i32) -> (i32, i32) {
    %c0_i32 = arith.constant 0 : i32
    %c0_i32_0 = arith.constant 0 : i32
    %c0_i32_1 = arith.constant 0 : i32
    return %c0_i32, %c0_i32_0 : i32, i32
  }
  func.func @transform_5(%arg0: i32) -> (i32, i32) {
    %c0_i32 = arith.constant 0 : i32
    %c0_i32_0 = arith.constant 0 : i32
    %c0_i32_1 = arith.constant 0 : i32
    return %c0_i32, %c0_i32_0 : i32, i32
  }
  func.func @transform_6(%arg0: i32) -> (i32, i32) {
    %c0_i32 = arith.constant 0 : i32
    %c0_i32_0 = arith.constant 0 : i32
    %c0_i32_1 = arith.constant 0 : i32
    return %c0_i32, %c0_i32_0 : i32, i32
  }
  func.func @transform_7(%arg0: i32) -> (i32, i32) {
    %c0_i32 = arith.constant 0 : i32
    %c0_i32_0 = arith.constant 0 : i32
    return %arg0, %c0_i32 : i32, i32
  }
}

</mosaic_0001>

<llo_original>
// kernel: mlp_forward.1
$region0: #{mlp_forward.1}
  #allocation0 [shape = 'u32[]', space=smem, size = 0x4, offset = 0x4, fixed_abs, tag = 'smem constant byte address 0x4 - core index']
  #allocation1 [shape = 'u32[144,128]{1,0:T(1,128)}', space=vmem, size = 0x12000, scoped, tag = 'internal scratch']
  %s0 = inlined_call_operand.vmem [shape: f32[25,256], index: 0, kind: input, shape index: {}]
  %s1 = inlined_call_operand.vmem [shape: bf16[256,256], index: 1, kind: input, shape index: {}]
  %s2 = inlined_call_operand.vmem [shape: f32[1,256], index: 2, kind: input, shape index: {}]
  %s3 = inlined_call_operand.vmem [shape: bf16[256,256], index: 3, kind: input, shape index: {}]
  %s4 = inlined_call_operand.vmem [shape: f32[1,256], index: 4, kind: input, shape index: {}]
  %s5 = inlined_call_operand.vmem [shape: bf16[256,128], index: 5, kind: input, shape index: {}]
  %s6 = inlined_call_operand.vmem [shape: f32[1,128], index: 6, kind: input, shape index: {}]
  %s7 = inlined_call_operand.vmem [shape: f32[25,128], index: 7, kind: output, shape index: {}]
  %s8 = sld [smem:[#allocation0]]
  $region61: #{mlp_forward.1} parent=0
    _
  %s10 = ssub.s32 1, %s8
  %s11 = scalar_select 0, %s10, %s8
  loop: start=0, step=1, limit=4
  $region2: #{mlp_forward.1} parent=0 // loop_pre_header
    _
  $region3: #{mlp_forward.1} parent=0 // loop_header
    %s13 = sphi 0, %s17
    %p14 = scmp.ge.s32.totalorder %s13, 4
    %s23 = sphi 0, %s25
    %s26 = sphi 0, %s23
    %s27 = sphi 0, %s26
    %s43 = sphi 0, %s27
    %s47 = sphi 0, %s47
    %s49 = sphi 0, %s47
    %s50 = sphi 0, %s49
    %s64 = sphi 0, %s50
    %s68 = sphi 0, %s68
    %s70 = sphi 0, %s68
    %s71 = sphi 0, %s70
    %s85 = sphi 0, %s71
    %s89 = sphi 0, %s89
    %s91 = sphi 0, %s89
    %s92 = sphi 0, %s91
    %s106 = sphi 0, %s92
    %s110 = sphi 0, %s110
    %s112 = sphi 0, %s110
    %s113 = sphi 0, %s112
    %s127 = sphi 0, %s113
    %s131 = sphi 0, %s131
    %s133 = sphi 0, %s131
    %s134 = sphi 0, %s133
    %s148 = sphi 0, %s134
    %s152 = sphi 0, %s152
    %s154 = sphi 0, %s152
    %s155 = sphi 0, %s154
    %s169 = sphi 0, %s155
    %s175 = sphi 0, %s177
    %s178 = sphi 0, %s175
    %s179 = sphi 0, %s178
    %s195 = sphi 0, %s179
  $region4: #{mlp_forward.1} parent=0 // loop_header_branch
    %16 = sbr.rel (%p14) target = $region8
  $region5: #{mlp_forward.1} parent=0 // loop_body
    %s18 = ssub.s32 %s13, 1
    %s19 = ssub.s32 %s13, 2
    %s20 = sadd.s32 %s13, 1
    %s21 = ssub.s32 %s13, %s20
    %p22 = scmp.eq.s32.totalorder %s21, 0
    %s24 = sadd.s32 %s23, 1
    %s25 = scalar_select %p22, %s23, %s24
    %p28 = pneg %p22
    %p29 = scmp.eq.s32.totalorder %s13, 1
    %p30 = por %p28, %p29
    %p31 = scmp.ne.s32.totalorder %s23, %s26
    %p32 = scmp.eq.s32.totalorder %s13, 0
    %p33 = por %p31, %p32
    %p34 = scmp.ne.s32.totalorder %s23, %s26
    %p35 = scmp.eq.s32.totalorder %s18, 1
    %p36 = por %p34, %p35
    %p37 = scmp.ne.s32.totalorder %s26, %s27
    %p38 = scmp.eq.s32.totalorder %s18, 0
    %p39 = por %p37, %p38
    %p40 = scmp.ne.s32.totalorder %s26, %s27
    %p41 = scmp.eq.s32.totalorder %s19, 1
    %p42 = por %p40, %p41
    %p44 = scmp.ne.s32.totalorder %s27, %s43
    %p45 = scmp.eq.s32.totalorder %s19, 0
    %p46 = por %p44, %p45
    %s48 = sadd.s32 %s47, 1
    %p51 = scmp.eq.s32.totalorder %s13, 1
    %p52 = scmp.ne.s32.totalorder %s47, %s49
    %p53 = scmp.eq.s32.totalorder %s13, 0
    %p54 = por %p52, %p53
    %p55 = scmp.ne.s32.totalorder %s47, %s49
    %p56 = scmp.eq.s32.totalorder %s18, 1
    %p57 = por %p55, %p56
    %p58 = scmp.ne.s32.totalorder %s49, %s50
    %p59 = scmp.eq.s32.totalorder %s18, 0
    %p60 = por %p58, %p59
    %p61 = scmp.ne.s32.totalorder %s49, %s50
    %p62 = scmp.eq.s32.totalorder %s19, 1
    %p63 = por %p61, %p62
    %p65 = scmp.ne.s32.totalorder %s50, %s64
    %p66 = scmp.eq.s32.totalorder %s19, 0
    %p67 = por %p65, %p66
    %s69 = sadd.s32 %s68, 1
    %p72 = scmp.eq.s32.totalorder %s13, 1
    %p73 = scmp.ne.s32.totalorder %s68, %s70
    %p74 = scmp.eq.s32.totalorder %s13, 0
    %p75 = por %p73, %p74
    %p76 = scmp.ne.s32.totalorder %s68, %s70
    %p77 = scmp.eq.s32.totalorder %s18, 1
    %p78 = por %p76, %p77
    %p79 = scmp.ne.s32.totalorder %s70, %s71
    %p80 = scmp.eq.s32.totalorder %s18, 0
    %p81 = por %p79, %p80
    %p82 = scmp.ne.s32.totalorder %s70, %s71
    %p83 = scmp.eq.s32.totalorder %s19, 1
    %p84 = por %p82, %p83
    %p86 = scmp.ne.s32.totalorder %s71, %s85
    %p87 = scmp.eq.s32.totalorder %s19, 0
    %p88 = por %p86, %p87
    %s90 = sadd.s32 %s89, 1
    %p93 = scmp.eq.s32.totalorder %s13, 1
    %p94 = scmp.ne.s32.totalorder %s89, %s91
    %p95 = scmp.eq.s32.totalorder %s13, 0
    %p96 = por %p94, %p95
    %p97 = scmp.ne.s32.totalorder %s89, %s91
    %p98 = scmp.eq.s32.totalorder %s18, 1
    %p99 = por %p97, %p98
    %p100 = scmp.ne.s32.totalorder %s91, %s92
    %p101 = scmp.eq.s32.totalorder %s18, 0
    %p102 = por %p100, %p101
    %p103 = scmp.ne.s32.totalorder %s91, %s92
    %p104 = scmp.eq.s32.totalorder %s19, 1
    %p105 = por %p103, %p104
    %p107 = scmp.ne.s32.totalorder %s92, %s106
    %p108 = scmp.eq.s32.totalorder %s19, 0
    %p109 = por %p107, %p108
    %s111 = sadd.s32 %s110, 1
    %p114 = scmp.eq.s32.totalorder %s13, 1
    %p115 = scmp.ne.s32.totalorder %s110, %s112
    %p116 = scmp.eq.s32.totalorder %s13, 0
    %p117 = por %p115, %p116
    %p118 = scmp.ne.s32.totalorder %s110, %s112
    %p119 = scmp.eq.s32.totalorder %s18, 1
    %p120 = por %p118, %p119
    %p121 = scmp.ne.s32.totalorder %s112, %s113
    %p122 = scmp.eq.s32.totalorder %s18, 0
    %p123 = por %p121, %p122
    %p124 = scmp.ne.s32.totalorder %s112, %s113
    %p125 = scmp.eq.s32.totalorder %s19, 1
    %p126 = por %p124, %p125
    %p128 = scmp.ne.s32.totalorder %s113, %s127
    %p129 = scmp.eq.s32.totalorder %s19, 0
    %p130 = por %p128, %p129
    %s132 = sadd.s32 %s131, 1
    %p135 = scmp.eq.s32.totalorder %s13, 1
    %p136 = scmp.ne.s32.totalorder %s131, %s133
    %p137 = scmp.eq.s32.totalorder %s13, 0
    %p138 = por %p136, %p137
    %p139 = scmp.ne.s32.totalorder %s131, %s133
    %p140 = scmp.eq.s32.totalorder %s18, 1
    %p141 = por %p139, %p140
    %p142 = scmp.ne.s32.totalorder %s133, %s134
    %p143 = scmp.eq.s32.totalorder %s18, 0
    %p144 = por %p142, %p143
    %p145 = scmp.ne.s32.totalorder %s133, %s134
    %p146 = scmp.eq.s32.totalorder %s19, 1
    %p147 = por %p145, %p146
    %p149 = scmp.ne.s32.totalorder %s134, %s148
    %p150 = scmp.eq.s32.totalorder %s19, 0
    %p151 = por %p149, %p150
    %s153 = sadd.s32 %s152, 1
    %p156 = scmp.eq.s32.totalorder %s13, 1
    %p157 = scmp.ne.s32.totalorder %s152, %s154
    %p158 = scmp.eq.s32.totalorder %s13, 0
    %p159 = por %p157, %p158
    %p160 = scmp.ne.s32.totalorder %s152, %s154
    %p161 = scmp.eq.s32.totalorder %s18, 1
    %p162 = por %p160, %p161
    %p163 = scmp.ne.s32.totalorder %s154, %s155
    %p164 = scmp.eq.s32.totalorder %s18, 0
    %p165 = por %p163, %p164
    %p166 = scmp.ne.s32.totalorder %s154, %s155
    %p167 = scmp.eq.s32.totalorder %s19, 1
    %p168 = por %p166, %p167
    %p170 = scmp.ne.s32.totalorder %s155, %s169
    %p171 = scmp.eq.s32.totalorder %s19, 0
    %p172 = por %p170, %p171
    %s173 = ssub.s32 %s13, %s20
    %p174 = scmp.eq.s32.totalorder %s173, 0
    %s176 = sadd.s32 %s175, 1
    %s177 = scalar_select %p174, %s175, %s176
    %p180 = pneg %p174
    %p181 = scmp.eq.s32.totalorder %s13, 1
    %p182 = por %p180, %p181
    %p183 = scmp.ne.s32.totalorder %s175, %s178
    %p184 = scmp.eq.s32.totalorder %s13, 0
    %p185 = por %p183, %p184
    %p186 = scmp.ne.s32.totalorder %s175, %s178
    %p187 = scmp.eq.s32.totalorder %s18, 1
    %p188 = por %p186, %p187
    %p189 = scmp.ne.s32.totalorder %s178, %s179
    %p190 = scmp.eq.s32.totalorder %s18, 0
    %p191 = por %p189, %p190
    %p192 = scmp.ne.s32.totalorder %s178, %s179
    %p193 = scmp.eq.s32.totalorder %s19, 1
    %p194 = por %p192, %p193
    %p196 = scmp.ne.s32.totalorder %s179, %s195
    %p197 = scmp.eq.s32.totalorder %s19, 0
    %p198 = por %p196, %p197
    %p199 = scmp.le.s32.totalorder 1, %s13
    %p200 = scmp.lt.s32.totalorder %s13, 3
    %p201 = pnand %p199, %p200
    %p202 = pneg %p201
    // Predicated region
    $region9: #{mlp_forward.1} parent=5 // pred_check
      _
    $region10: #{mlp_forward.1} parent=5 // pred_check_branch
      %204 = sbr.rel (%p201) target = $region12
    $region11: #{mlp_forward.1} parent=5 // pred_region
      %s205 = ssub.s32 %s13, 1
      // Predicated region
      $region13: #{mlp_forward.1} parent=11 // pred_check
        %p206 = pneg %p60
      $region14: #{mlp_forward.1} parent=11 // pred_check_branch
        %208 = sbr.rel (%p206) target = $region16
      $region15: #{mlp_forward.1} parent=11 // pred_region
        _
      $region16: #{mlp_forward.1} parent=11 // pred_fallthru
        _
      // Predicated region
      $region17: #{mlp_forward.1} parent=11 // pred_check
        %p209 = pneg %p81
      $region18: #{mlp_forward.1} parent=11 // pred_check_branch
        %211 = sbr.rel (%p209) target = $region20
      $region19: #{mlp_forward.1} parent=11 // pred_region
        _
      $region20: #{mlp_forward.1} parent=11 // pred_fallthru
        _
      // Predicated region
      $region21: #{mlp_forward.1} parent=11 // pred_check
        %p212 = pneg %p102
      $region22: #{mlp_forward.1} parent=11 // pred_check_branch
        %214 = sbr.rel (%p212) target = $region24
      $region23: #{mlp_forward.1} parent=11 // pred_region
        _
      $region24: #{mlp_forward.1} parent=11 // pred_fallthru
        _
      // Predicated region
      $region25: #{mlp_forward.1} parent=11 // pred_check
        %p215 = pneg %p123
      $region26: #{mlp_forward.1} parent=11 // pred_check_branch
        %217 = sbr.rel (%p215) target = $region28
      $region27: #{mlp_forward.1} parent=11 // pred_region
        _
      $region28: #{mlp_forward.1} parent=11 // pred_fallthru
        _
      // Predicated region
      $region29: #{mlp_forward.1} parent=11 // pred_check
        %p218 = pneg %p144
      $region30: #{mlp_forward.1} parent=11 // pred_check_branch
        %220 = sbr.rel (%p218) target = $region32
      $region31: #{mlp_forward.1} parent=11 // pred_region
        _
      $region32: #{mlp_forward.1} parent=11 // pred_fallthru
        _
      // Predicated region
      $region33: #{mlp_forward.1} parent=11 // pred_check
        %p221 = pneg %p165
      $region34: #{mlp_forward.1} parent=11 // pred_check_branch
        %223 = sbr.rel (%p221) target = $region36
      $region35: #{mlp_forward.1} parent=11 // pred_region
        _
      $region36: #{mlp_forward.1} parent=11 // pred_fallthru
        _
    $region12: #{mlp_forward.1} parent=5 // pred_fallthru
      _
    %p224 = scmp.lt.s32.totalorder %s13, 2
    // Predicated region
    $region37: #{mlp_forward.1} parent=5 // pred_check
      %p225 = pneg %p224
    $region38: #{mlp_forward.1} parent=5 // pred_check_branch
      %227 = sbr.rel (%p225) target = $region40
    $region39: #{mlp_forward.1} parent=5 // pred_region
      // Predicated region
      $region41: #{mlp_forward.1} parent=39 // pred_check
        %p228 = pneg %p33
      $region42: #{mlp_forward.1} parent=39 // pred_check_branch
        %230 = sbr.rel (%p228) target = $region44
      $region43: #{mlp_forward.1} parent=39 // pred_region
        %s231 = smul.u32 2, %s13
        %p232 = scmp.lt.s32.totalorder %s231, 3
        %s233 = scalar_select %p232, %s231, 3
        %s234 = smul.addr %s233, 2
        %s235 = smul.addr %s234, 8
        %s236 = scalar_lea.vmem %s0, %s235
        %s237 = smul.u32 2, %s13
      $region44: #{mlp_forward.1} parent=39 // pred_fallthru
        _
    $region40: #{mlp_forward.1} parent=5 // pred_fallthru
      _
    %p238 = scmp.le.s32.totalorder 1, %s13
    %p239 = scmp.lt.s32.totalorder %s13, 3
    %p240 = pnand %p238, %p239
    %p241 = pneg %p240
    // Predicated region
    $region45: #{mlp_forward.1} parent=5 // pred_check
      _
    $region46: #{mlp_forward.1} parent=5 // pred_check_branch
      %243 = sbr.rel (%p240) target = $region48
    $region47: #{mlp_forward.1} parent=5 // pred_region
      %s244 = ssub.s32 %s13, 1
      %s245 = smul.u32 2, %s18
      %p246 = scmp.lt.s32.totalorder %s245, 3
      %s247 = scalar_select %p246, %s245, 3
      %s248 = smul.addr %s247, 2
      %s249 = smul.addr %s248, 8
      %s250 = scalar_lea.vmem %s0, %s249
      %p251 = pneg %p39
      %p252 = pneg %p36
      %p253 = pneg %p60
      %p254 = pneg %p57
      %p255 = pneg %p81
      %p256 = pneg %p78
      %p257 = pneg %p102
      %p258 = pneg %p99
      %p259 = pneg %p123
      %p260 = pneg %p120
      %p261 = pneg %p144
      %p262 = pneg %p141
      %p263 = pneg %p165
      %p264 = pneg %p162
      %p265 = pneg %p191
      %p266 = pneg %p188
      %s267 = smul.u32 2, %s18
      %p268 = scmp.lt.s32.totalorder %s267, 3
      %s269 = scalar_select %p268, %s267, 3
      %s270 = smul.addr %s269, 8
      %s271 = scalar_lea.vmem %s7, %s270
      %s272 = smul.u32 2, %s18
      %p273 = scmp.lt.s32.totalorder %s272, 3
      %s274 = scalar_select %p273, %s272, 3
      %s275 = smul.addr %s274, 2
      %s276 = smul.addr %s275, 8
      %s277 = scalar_lea.vmem %s0, %s276
      %s278 = smul.u32 2, %s18
      %s279 = smul.u32 2, %s18
      %p280 = scmp.lt.s32.totalorder %s279, 3
      %s281 = scalar_select %p280, %s279, 3
      %s282 = smul.addr %s281, 8
      %s283 = scalar_lea.vmem %s7, %s282
      %s284 = smul.u32 2, %s18
      %v286 = vld [vmem:[%s277] sm:$0xff]
      %v287 = vld [vmem:[%s277 + $0x8] sm:$0xff]
      %v288 = vld [vmem:[%s277 + $0x10] sm:$0xff]
      %v289 = vld [vmem:[%s277 + $0x18] sm:$0xff]
      %v290 = vpack.c.bf16 %v288, %v286
      %v291 = vpack.c.bf16 %v289, %v287
      %v292 = vld [vmem:[%s1] sm:$0xff]
      %v293 = vld [vmem:[%s1 + $0x8] sm:$0xff]
      %v294 = vld [vmem:[%s1 + $0x10] sm:$0xff]
      %v295 = vld [vmem:[%s1 + $0x18] sm:$0xff]
      %v296 = vld [vmem:[%s1 + $0x20] sm:$0xff]
      %v297 = vld [vmem:[%s1 + $0x28] sm:$0xff]
      %v298 = vld [vmem:[%s1 + $0x30] sm:$0xff]
      %v299 = vld [vmem:[%s1 + $0x38] sm:$0xff]
      %v300 = vld [vmem:[%s1 + $0x40] sm:$0xff]
      %v301 = vld [vmem:[%s1 + $0x48] sm:$0xff]
      %v302 = vld [vmem:[%s1 + $0x50] sm:$0xff]
      %v303 = vld [vmem:[%s1 + $0x58] sm:$0xff]
      %v304 = vld [vmem:[%s1 + $0x60] sm:$0xff]
      %v305 = vld [vmem:[%s1 + $0x68] sm:$0xff]
      %v306 = vld [vmem:[%s1 + $0x70] sm:$0xff]
      %v307 = vld [vmem:[%s1 + $0x78] sm:$0xff]
      %v308 = vld [vmem:[%s1 + $0x80] sm:$0xff]
      %v309 = vld [vmem:[%s1 + $0x88] sm:$0xff]
      %v310 = vld [vmem:[%s1 + $0x90] sm:$0xff]
      %v311 = vld [vmem:[%s1 + $0x98] sm:$0xff]
      %v312 = vld [vmem:[%s1 + $0xa0] sm:$0xff]
      %v313 = vld [vmem:[%s1 + $0xa8] sm:$0xff]
      %v314 = vld [vmem:[%s1 + $0xb0] sm:$0xff]
      %v315 = vld [vmem:[%s1 + $0xb8] sm:$0xff]
      %v316 = vld [vmem:[%s1 + $0xc0] sm:$0xff]
      %v317 = vld [vmem:[%s1 + $0xc8] sm:$0xff]
      %v318 = vld [vmem:[%s1 + $0xd0] sm:$0xff]
      %v319 = vld [vmem:[%s1 + $0xd8] sm:$0xff]
      %v320 = vld [vmem:[%s1 + $0xe0] sm:$0xff]
      %v321 = vld [vmem:[%s1 + $0xe8] sm:$0xff]
      %v322 = vld [vmem:[%s1 + $0xf0] sm:$0xff]
      %v323 = vld [vmem:[%s1 + $0xf8] sm:$0xff]
      %v324 = vld [vmem:[%s2] sm:$0x3]
      %v326 = vlaneseq
      %v327 = vshrl.u32 %v326, 7
      %v328 = vsub.s32 0, %v327
      %v329 = vrot.slane %v324, %v328
      %v330 = vlaneseq
      %v331 = vshrl.u32 %v330, 7
      %v332 = vsub.s32 1, %v331
      %v333 = vrot.slane %v324, %v332
      %v368 = vunpack.c.l.b16 %v292
      %v369 = vunpack.c.h.b16 %v292
      %v370 = vunpack.c.l.b16 %v293
      %v371 = vunpack.c.h.b16 %v293
      %v372 = vunpack.c.l.b16 %v294
      %v373 = vunpack.c.h.b16 %v294
      %v374 = vunpack.c.l.b16 %v295
      %v375 = vunpack.c.h.b16 %v295
      %v376 = vunpack.c.l.b16 %v296
      %v377 = vunpack.c.h.b16 %v296
      %v378 = vunpack.c.l.b16 %v297
      %v379 = vunpack.c.h.b16 %v297
      %v380 = vunpack.c.l.b16 %v298
      %v381 = vunpack.c.h.b16 %v298
      %v382 = vunpack.c.l.b16 %v299
      %v383 = vunpack.c.h.b16 %v299
      %v384 = vunpack.c.l.b16 %v300
      %v385 = vunpack.c.h.b16 %v300
      %v386 = vunpack.c.l.b16 %v301
      %v387 = vunpack.c.h.b16 %v301
      %v388 = vunpack.c.l.b16 %v302
      %v389 = vunpack.c.h.b16 %v302
      %v390 = vunpack.c.l.b16 %v303
      %v391 = vunpack.c.h.b16 %v303
      %v392 = vunpack.c.l.b16 %v304
      %v393 = vunpack.c.h.b16 %v304
      %v394 = vunpack.c.l.b16 %v305
      %v395 = vunpack.c.h.b16 %v305
      %v396 = vunpack.c.l.b16 %v306
      %v397 = vunpack.c.h.b16 %v306
      %v398 = vunpack.c.l.b16 %v307
      %v399 = vunpack.c.h.b16 %v307
      %v400 = vunpack.c.l.b16 %v308
      %v401 = vunpack.c.h.b16 %v308
      %v402 = vunpack.c.l.b16 %v309
      %v403 = vunpack.c.h.b16 %v309
      %v404 = vunpack.c.l.b16 %v310
      %v405 = vunpack.c.h.b16 %v310
      %v406 = vunpack.c.l.b16 %v311
      %v407 = vunpack.c.h.b16 %v311
      %v408 = vunpack.c.l.b16 %v312
      %v409 = vunpack.c.h.b16 %v312
      %v410 = vunpack.c.l.b16 %v313
      %v411 = vunpack.c.h.b16 %v313
      %v412 = vunpack.c.l.b16 %v314
      %v413 = vunpack.c.h.b16 %v314
      %v414 = vunpack.c.l.b16 %v315
      %v415 = vunpack.c.h.b16 %v315
      %v416 = vunpack.c.l.b16 %v316
      %v417 = vunpack.c.h.b16 %v316
      %v418 = vunpack.c.l.b16 %v317
      %v419 = vunpack.c.h.b16 %v317
      %v420 = vunpack.c.l.b16 %v318
      %v421 = vunpack.c.h.b16 %v318
      %v422 = vunpack.c.l.b16 %v319
      %v423 = vunpack.c.h.b16 %v319
      %v424 = vunpack.c.l.b16 %v320
      %v425 = vunpack.c.h.b16 %v320
      %v426 = vunpack.c.l.b16 %v321
      %v427 = vunpack.c.h.b16 %v321
      %v428 = vunpack.c.l.b16 %v322
      %v429 = vunpack.c.h.b16 %v322
      %v430 = vunpack.c.l.b16 %v323
      %v431 = vunpack.c.h.b16 %v323
      %v432 = vpack.c.b16 %v370, %v368
      %v433 = vpack.c.b16 %v371, %v369
      %v434 = vpack.c.b16 %v374, %v372
      %v435 = vpack.c.b16 %v375, %v373
      %v436 = vpack.c.b16 %v378, %v376
      %v437 = vpack.c.b16 %v379, %v377
      %v438 = vpack.c.b16 %v382, %v380
      %v439 = vpack.c.b16 %v383, %v381
      %v440 = vpack.c.b16 %v386, %v384
      %v441 = vpack.c.b16 %v387, %v385
      %v442 = vpack.c.b16 %v390, %v388
      %v443 = vpack.c.b16 %v391, %v389
      %v444 = vpack.c.b16 %v394, %v392
      %v445 = vpack.c.b16 %v395, %v393
      %v446 = vpack.c.b16 %v398, %v396
      %v447 = vpack.c.b16 %v399, %v397
      %v448 = vpack.c.b16 %v402, %v400
      %v449 = vpack.c.b16 %v403, %v401
      %v450 = vpack.c.b16 %v406, %v404
      %v451 = vpack.c.b16 %v407, %v405
      %v452 = vpack.c.b16 %v410, %v408
      %v453 = vpack.c.b16 %v411, %v409
      %v454 = vpack.c.b16 %v414, %v412
      %v455 = vpack.c.b16 %v415, %v413
      %v456 = vpack.c.b16 %v418, %v416
      %v457 = vpack.c.b16 %v419, %v417
      %v458 = vpack.c.b16 %v422, %v420
      %v459 = vpack.c.b16 %v423, %v421
      %v460 = vpack.c.b16 %v426, %v424
      %v461 = vpack.c.b16 %v427, %v425
      %v462 = vpack.c.b16 %v430, %v428
      %v463 = vpack.c.b16 %v431, %v429
      %496 = vmatprep.subr.bf16.mxu0 %v433
      %497 = vmatpush1.bf16.msra.mxu0 %v432
      %498 = vmatprep.subr.bf16.mxu0 %v435
      %499 = vmatpush1.bf16.msra.mxu0 %v434
      %500 = vmatprep.subr.bf16.mxu0 %v437
      %501 = vmatpush1.bf16.msra.mxu0 %v436
      %502 = vmatprep.subr.bf16.mxu0 %v439
      %503 = vmatpush1.bf16.msra.mxu0 %v438
      %504 = vmatprep.subr.bf16.mxu0 %v441
      %505 = vmatpush1.bf16.msra.mxu0 %v440
      %506 = vmatprep.subr.bf16.mxu0 %v443
      %507 = vmatpush1.bf16.msra.mxu0 %v442
      %508 = vmatprep.subr.bf16.mxu0 %v445
      %509 = vmatpush1.bf16.msra.mxu0 %v444
      %510 = vmatprep.subr.bf16.mxu0 %v447
      %511 = vmatpush1.bf16.msra.mxu0 %v446
      %512 = vmatprep.subr.bf16.mxu0 %v449
      %513 = vmatpush1.bf16.msra.mxu0 %v448
      %514 = vmatprep.subr.bf16.mxu0 %v451
      %515 = vmatpush1.bf16.msra.mxu0 %v450
      %516 = vmatprep.subr.bf16.mxu0 %v453
      %517 = vmatpush1.bf16.msra.mxu0 %v452
      %518 = vmatprep.subr.bf16.mxu0 %v455
      %519 = vmatpush1.bf16.msra.mxu0 %v454
      %520 = vmatprep.subr.bf16.mxu0 %v457
      %521 = vmatpush1.bf16.msra.mxu0 %v456
      %522 = vmatprep.subr.bf16.mxu0 %v459
      %523 = vmatpush1.bf16.msra.mxu0 %v458
      %524 = vmatprep.subr.bf16.mxu0 %v461
      %525 = vmatpush1.bf16.msra.mxu0 %v460
      %526 = vmatprep.subr.bf16.mxu0 %v463
      %527 = vmatpush1.bf16.msra.mxu0 %v462
      %528 = vmatprep.mubr.bf16.mxu0 %v291
      %529 = vmatmul.mubr.bf16.gmra.mrb[0].mxu0 %v290
      %v530 = vpop.f32.mrb[0].mxu0
      %v531 = vadd.f32 %v329, %v530
      %v532 = vpop.f32.mrb[0].mxu0
      %v533 = vadd.f32 %v333, %v532
      %v534 = vpop.f32.mrb[0].mxu0
      %v535 = vadd.f32 %v329, %v534
      %v536 = vpop.f32.mrb[0].mxu0
      %v537 = vadd.f32 %v333, %v536
      %538 = vdwg.mxu0
      %v539 = vmax.f32 %v531, 0.0
      %v540 = vmax.f32 %v533, 0.0
      %v541 = vmax.f32 %v535, 0.0
      %v542 = vmax.f32 %v537, 0.0
      %v543 = vpack.c.bf16 %v541, %v539
      %v544 = vpack.c.bf16 %v542, %v540
      %v545 = vld [vmem:[%s3] sm:$0xff]
      %v546 = vld [vmem:[%s3 + $0x8] sm:$0xff]
      %v547 = vld [vmem:[%s3 + $0x10] sm:$0xff]
      %v548 = vld [vmem:[%s3 + $0x18] sm:$0xff]
      %v549 = vld [vmem:[%s3 + $0x20] sm:$0xff]
      %v550 = vld [vmem:[%s3 + $0x28] sm:$0xff]
      %v551 = vld [vmem:[%s3 + $0x30] sm:$0xff]
      %v552 = vld [vmem:[%s3 + $0x38] sm:$0xff]
      %v553 = vld [vmem:[%s3 + $0x40] sm:$0xff]
      %v554 = vld [vmem:[%s3 + $0x48] sm:$0xff]
      %v555 = vld [vmem:[%s3 + $0x50] sm:$0xff]
      %v556 = vld [vmem:[%s3 + $0x58] sm:$0xff]
      %v557 = vld [vmem:[%s3 + $0x60] sm:$0xff]
      %v558 = vld [vmem:[%s3 + $0x68] sm:$0xff]
      %v559 = vld [vmem:[%s3 + $0x70] sm:$0xff]
      %v560 = vld [vmem:[%s3 + $0x78] sm:$0xff]
      %v561 = vld [vmem:[%s3 + $0x80] sm:$0xff]
      %v562 = vld [vmem:[%s3 + $0x88] sm:$0xff]
      %v563 = vld [vmem:[%s3 + $0x90] sm:$0xff]
      %v564 = vld [vmem:[%s3 + $0x98] sm:$0xff]
      %v565 = vld [vmem:[%s3 + $0xa0] sm:$0xff]
      %v566 = vld [vmem:[%s3 + $0xa8] sm:$0xff]
      %v567 = vld [vmem:[%s3 + $0xb0] sm:$0xff]
      %v568 = vld [vmem:[%s3 + $0xb8] sm:$0xff]
      %v569 = vld [vmem:[%s3 + $0xc0] sm:$0xff]
      %v570 = vld [vmem:[%s3 + $0xc8] sm:$0xff]
      %v571 = vld [vmem:[%s3 + $0xd0] sm:$0xff]
      %v572 = vld [vmem:[%s3 + $0xd8] sm:$0xff]
      %v573 = vld [vmem:[%s3 + $0xe0] sm:$0xff]
      %v574 = vld [vmem:[%s3 + $0xe8] sm:$0xff]
      %v575 = vld [vmem:[%s3 + $0xf0] sm:$0xff]
      %v576 = vld [vmem:[%s3 + $0xf8] sm:$0xff]
      %v577 = vld [vmem:[%s4] sm:$0x3]
      %v579 = vlaneseq
      %v580 = vshrl.u32 %v579, 7
      %v581 = vsub.s32 0, %v580
      %v582 = vrot.slane %v577, %v581
      %v583 = vlaneseq
      %v584 = vshrl.u32 %v583, 7
      %v585 = vsub.s32 1, %v584
      %v586 = vrot.slane %v577, %v585
      %v621 = vunpack.c.l.b16 %v545
      %v622 = vunpack.c.h.b16 %v545
      %v623 = vunpack.c.l.b16 %v546
      %v624 = vunpack.c.h.b16 %v546
      %v625 = vunpack.c.l.b16 %v547
      %v626 = vunpack.c.h.b16 %v547
      %v627 = vunpack.c.l.b16 %v548
      %v628 = vunpack.c.h.b16 %v548
      %v629 = vunpack.c.l.b16 %v549
      %v630 = vunpack.c.h.b16 %v549
      %v631 = vunpack.c.l.b16 %v550
      %v632 = vunpack.c.h.b16 %v550
      %v633 = vunpack.c.l.b16 %v551
      %v634 = vunpack.c.h.b16 %v551
      %v635 = vunpack.c.l.b16 %v552
      %v636 = vunpack.c.h.b16 %v552
      %v637 = vunpack.c.l.b16 %v553
      %v638 = vunpack.c.h.b16 %v553
      %v639 = vunpack.c.l.b16 %v554
      %v640 = vunpack.c.h.b16 %v554
      %v641 = vunpack.c.l.b16 %v555
      %v642 = vunpack.c.h.b16 %v555
      %v643 = vunpack.c.l.b16 %v556
      %v644 = vunpack.c.h.b16 %v556
      %v645 = vunpack.c.l.b16 %v557
      %v646 = vunpack.c.h.b16 %v557
      %v647 = vunpack.c.l.b16 %v558
      %v648 = vunpack.c.h.b16 %v558
      %v649 = vunpack.c.l.b16 %v559
      %v650 = vunpack.c.h.b16 %v559
      %v651 = vunpack.c.l.b16 %v560
      %v652 = vunpack.c.h.b16 %v560
      %v653 = vunpack.c.l.b16 %v561
      %v654 = vunpack.c.h.b16 %v561
      %v655 = vunpack.c.l.b16 %v562
      %v656 = vunpack.c.h.b16 %v562
      %v657 = vunpack.c.l.b16 %v563
      %v658 = vunpack.c.h.b16 %v563
      %v659 = vunpack.c.l.b16 %v564
      %v660 = vunpack.c.h.b16 %v564
      %v661 = vunpack.c.l.b16 %v565
      %v662 = vunpack.c.h.b16 %v565
      %v663 = vunpack.c.l.b16 %v566
      %v664 = vunpack.c.h.b16 %v566
      %v665 = vunpack.c.l.b16 %v567
      %v666 = vunpack.c.h.b16 %v567
      %v667 = vunpack.c.l.b16 %v568
      %v668 = vunpack.c.h.b16 %v568
      %v669 = vunpack.c.l.b16 %v569
      %v670 = vunpack.c.h.b16 %v569
      %v671 = vunpack.c.l.b16 %v570
      %v672 = vunpack.c.h.b16 %v570
      %v673 = vunpack.c.l.b16 %v571
      %v674 = vunpack.c.h.b16 %v571
      %v675 = vunpack.c.l.b16 %v572
      %v676 = vunpack.c.h.b16 %v572
      %v677 = vunpack.c.l.b16 %v573
      %v678 = vunpack.c.h.b16 %v573
      %v679 = vunpack.c.l.b16 %v574
      %v680 = vunpack.c.h.b16 %v574
      %v681 = vunpack.c.l.b16 %v575
      %v682 = vunpack.c.h.b16 %v575
      %v683 = vunpack.c.l.b16 %v576
      %v684 = vunpack.c.h.b16 %v576
      %v685 = vpack.c.b16 %v623, %v621
      %v686 = vpack.c.b16 %v624, %v622
      %v687 = vpack.c.b16 %v627, %v625
      %v688 = vpack.c.b16 %v628, %v626
      %v689 = vpack.c.b16 %v631, %v629
      %v690 = vpack.c.b16 %v632, %v630
      %v691 = vpack.c.b16 %v635, %v633
      %v692 = vpack.c.b16 %v636, %v634
      %v693 = vpack.c.b16 %v639, %v637
      %v694 = vpack.c.b16 %v640, %v638
      %v695 = vpack.c.b16 %v643, %v641
      %v696 = vpack.c.b16 %v644, %v642
      %v697 = vpack.c.b16 %v647, %v645
      %v698 = vpack.c.b16 %v648, %v646
      %v699 = vpack.c.b16 %v651, %v649
      %v700 = vpack.c.b16 %v652, %v650
      %v701 = vpack.c.b16 %v655, %v653
      %v702 = vpack.c.b16 %v656, %v654
      %v703 = vpack.c.b16 %v659, %v657
      %v704 = vpack.c.b16 %v660, %v658
      %v705 = vpack.c.b16 %v663, %v661
      %v706 = vpack.c.b16 %v664, %v662
      %v707 = vpack.c.b16 %v667, %v665
      %v708 = vpack.c.b16 %v668, %v666
      %v709 = vpack.c.b16 %v671, %v669
      %v710 = vpack.c.b16 %v672, %v670
      %v711 = vpack.c.b16 %v675, %v673
      %v712 = vpack.c.b16 %v676, %v674
      %v713 = vpack.c.b16 %v679, %v677
      %v714 = vpack.c.b16 %v680, %v678
      %v715 = vpack.c.b16 %v683, %v681
      %v716 = vpack.c.b16 %v684, %v682
      %749 = vmatprep.subr.bf16.mxu0 %v686
      %750 = vmatpush1.bf16.msra.mxu0 %v685
      %751 = vmatprep.subr.bf16.mxu0 %v688
      %752 = vmatpush1.bf16.msra.mxu0 %v687
      %753 = vmatprep.subr.bf16.mxu0 %v690
      %754 = vmatpush1.bf16.msra.mxu0 %v689
      %755 = vmatprep.subr.bf16.mxu0 %v692
      %756 = vmatpush1.bf16.msra.mxu0 %v691
      %757 = vmatprep.subr.bf16.mxu0 %v694
      %758 = vmatpush1.bf16.msra.mxu0 %v693
      %759 = vmatprep.subr.bf16.mxu0 %v696
      %760 = vmatpush1.bf16.msra.mxu0 %v695
      %761 = vmatprep.subr.bf16.mxu0 %v698
      %762 = vmatpush1.bf16.msra.mxu0 %v697
      %763 = vmatprep.subr.bf16.mxu0 %v700
      %764 = vmatpush1.bf16.msra.mxu0 %v699
      %765 = vmatprep.subr.bf16.mxu0 %v702
      %766 = vmatpush1.bf16.msra.mxu0 %v701
      %767 = vmatprep.subr.bf16.mxu0 %v704
      %768 = vmatpush1.bf16.msra.mxu0 %v703
      %769 = vmatprep.subr.bf16.mxu0 %v706
      %770 = vmatpush1.bf16.msra.mxu0 %v705
      %771 = vmatprep.subr.bf16.mxu0 %v708
      %772 = vmatpush1.bf16.msra.mxu0 %v707
      %773 = vmatprep.subr.bf16.mxu0 %v710
      %774 = vmatpush1.bf16.msra.mxu0 %v709
      %775 = vmatprep.subr.bf16.mxu0 %v712
      %776 = vmatpush1.bf16.msra.mxu0 %v711
      %777 = vmatprep.subr.bf16.mxu0 %v714
      %778 = vmatpush1.bf16.msra.mxu0 %v713
      %779 = vmatprep.subr.bf16.mxu0 %v716
      %780 = vmatpush1.bf16.msra.mxu0 %v715
      %781 = vmatprep.mubr.bf16.mxu0 %v544
      %782 = vmatmul.mubr.bf16.gmra.mrb[0].mxu0 %v543
      %v783 = vpop.f32.mrb[0].mxu0
      %v784 = vadd.f32 %v582, %v783
      %v785 = vpop.f32.mrb[0].mxu0
      %v786 = vadd.f32 %v586, %v785
      %v787 = vpop.f32.mrb[0].mxu0
      %v788 = vadd.f32 %v582, %v787
      %v789 = vpop.f32.mrb[0].mxu0
      %v790 = vadd.f32 %v586, %v789
      %791 = vdwg.mxu0
      %v792 = vmax.f32 %v784, 0.0
      %v793 = vmax.f32 %v786, 0.0
      %v794 = vmax.f32 %v788, 0.0
      %v795 = vmax.f32 %v790, 0.0
      %v796 = vpack.c.bf16 %v794, %v792
      %v797 = vpack.c.bf16 %v795, %v793
      %v798 = vld [vmem:[%s5] sm:$0xf]
      %v799 = vld [vmem:[%s5 + $0x4] sm:$0xf]
      %v800 = vld [vmem:[%s5 + $0x8] sm:$0xf]
      %v801 = vld [vmem:[%s5 + $0xc] sm:$0xf]
      %v802 = vld [vmem:[%s5 + $0x10] sm:$0xf]
      %v803 = vld [vmem:[%s5 + $0x14] sm:$0xf]
      %v804 = vld [vmem:[%s5 + $0x18] sm:$0xf]
      %v805 = vld [vmem:[%s5 + $0x1c] sm:$0xf]
      %v806 = vld [vmem:[%s5 + $0x20] sm:$0xf]
      %v807 = vld [vmem:[%s5 + $0x24] sm:$0xf]
      %v808 = vld [vmem:[%s5 + $0x28] sm:$0xf]
      %v809 = vld [vmem:[%s5 + $0x2c] sm:$0xf]
      %v810 = vld [vmem:[%s5 + $0x30] sm:$0xf]
      %v811 = vld [vmem:[%s5 + $0x34] sm:$0xf]
      %v812 = vld [vmem:[%s5 + $0x38] sm:$0xf]
      %v813 = vld [vmem:[%s5 + $0x3c] sm:$0xf]
      %v814 = vld [vmem:[%s5 + $0x40] sm:$0xf]
      %v815 = vld [vmem:[%s5 + $0x44] sm:$0xf]
      %v816 = vld [vmem:[%s5 + $0x48] sm:$0xf]
      %v817 = vld [vmem:[%s5 + $0x4c] sm:$0xf]
      %v818 = vld [vmem:[%s5 + $0x50] sm:$0xf]
      %v819 = vld [vmem:[%s5 + $0x54] sm:$0xf]
      %v820 = vld [vmem:[%s5 + $0x58] sm:$0xf]
      %v821 = vld [vmem:[%s5 + $0x5c] sm:$0xf]
      %v822 = vld [vmem:[%s5 + $0x60] sm:$0xf]
      %v823 = vld [vmem:[%s5 + $0x64] sm:$0xf]
      %v824 = vld [vmem:[%s5 + $0x68] sm:$0xf]
      %v825 = vld [vmem:[%s5 + $0x6c] sm:$0xf]
      %v826 = vld [vmem:[%s5 + $0x70] sm:$0xf]
      %v827 = vld [vmem:[%s5 + $0x74] sm:$0xf]
      %v828 = vld [vmem:[%s5 + $0x78] sm:$0xf]
      %v829 = vld [vmem:[%s5 + $0x7c] sm:$0xf]
      %v830 = vld [vmem:[%s6] sm:$0x1]
      %v832 = vlaneseq
      %v833 = vshrl.u32 %v832, 7
      %v834 = vsub.s32 0, %v833
      %v835 = vrot.slane %v830, %v834
      %v869 = vunpack.c.l.b16 %v798
      %v870 = vunpack.c.l.b16 %v799
      %v871 = vunpack.c.l.b16 %v800
      %v872 = vunpack.c.l.b16 %v801
      %v873 = vunpack.c.l.b16 %v802
      %v874 = vunpack.c.l.b16 %v803
      %v875 = vunpack.c.l.b16 %v804
      %v876 = vunpack.c.l.b16 %v805
      %v877 = vunpack.c.l.b16 %v806
      %v878 = vunpack.c.l.b16 %v807
      %v879 = vunpack.c.l.b16 %v808
      %v880 = vunpack.c.l.b16 %v809
      %v881 = vunpack.c.l.b16 %v810
      %v882 = vunpack.c.l.b16 %v811
      %v883 = vunpack.c.l.b16 %v812
      %v884 = vunpack.c.l.b16 %v813
      %v885 = vunpack.c.l.b16 %v814
      %v886 = vunpack.c.l.b16 %v815
      %v887 = vunpack.c.l.b16 %v816
      %v888 = vunpack.c.l.b16 %v817
      %v889 = vunpack.c.l.b16 %v818
      %v890 = vunpack.c.l.b16 %v819
      %v891 = vunpack.c.l.b16 %v820
      %v892 = vunpack.c.l.b16 %v821
      %v893 = vunpack.c.l.b16 %v822
      %v894 = vunpack.c.l.b16 %v823
      %v895 = vunpack.c.l.b16 %v824
      %v896 = vunpack.c.l.b16 %v825
      %v897 = vunpack.c.l.b16 %v826
      %v898 = vunpack.c.l.b16 %v827
      %v899 = vunpack.c.l.b16 %v828
      %v900 = vunpack.c.l.b16 %v829
      %v901 = vpack.c.b16 %v870, %v869
      %v902 = vpack.c.b16 %v872, %v871
      %v903 = vpack.c.b16 %v874, %v873
      %v904 = vpack.c.b16 %v876, %v875
      %v905 = vpack.c.b16 %v878, %v877
      %v906 = vpack.c.b16 %v880, %v879
      %v907 = vpack.c.b16 %v882, %v881
      %v908 = vpack.c.b16 %v884, %v883
      %v909 = vpack.c.b16 %v886, %v885
      %v910 = vpack.c.b16 %v888, %v887
      %v911 = vpack.c.b16 %v890, %v889
      %v912 = vpack.c.b16 %v892, %v891
      %v913 = vpack.c.b16 %v894, %v893
      %v914 = vpack.c.b16 %v896, %v895
      %v915 = vpack.c.b16 %v898, %v897
      %v916 = vpack.c.b16 %v900, %v899
      %933 = vmatprep.subr.bf16.mxu0 0
      %934 = vmatpush1.bf16.msra.mxu0 %v901
      %935 = vmatprep.subr.bf16.mxu0 0
      %936 = vmatpush1.bf16.msra.mxu0 %v902
      %937 = vmatprep.subr.bf16.mxu0 0
      %938 = vmatpush1.bf16.msra.mxu0 %v903
      %939 = vmatprep.subr.bf16.mxu0 0
      %940 = vmatpush1.bf16.msra.mxu0 %v904
      %941 = vmatprep.subr.bf16.mxu0 0
      %942 = vmatpush1.bf16.msra.mxu0 %v905
      %943 = vmatprep.subr.bf16.mxu0 0
      %944 = vmatpush1.bf16.msra.mxu0 %v906
      %945 = vmatprep.subr.bf16.mxu0 0
      %946 = vmatpush1.bf16.msra.mxu0 %v907
      %947 = vmatprep.subr.bf16.mxu0 0
      %948 = vmatpush1.bf16.msra.mxu0 %v908
      %949 = vmatprep.subr.bf16.mxu0 0
      %950 = vmatpush1.bf16.msra.mxu0 %v909
      %951 = vmatprep.subr.bf16.mxu0 0
      %952 = vmatpush1.bf16.msra.mxu0 %v910
      %953 = vmatprep.subr.bf16.mxu0 0
      %954 = vmatpush1.bf16.msra.mxu0 %v911
      %955 = vmatprep.subr.bf16.mxu0 0
      %956 = vmatpush1.bf16.msra.mxu0 %v912
      %957 = vmatprep.subr.bf16.mxu0 0
      %958 = vmatpush1.bf16.msra.mxu0 %v913
      %959 = vmatprep.subr.bf16.mxu0 0
      %960 = vmatpush1.bf16.msra.mxu0 %v914
      %961 = vmatprep.subr.bf16.mxu0 0
      %962 = vmatpush1.bf16.msra.mxu0 %v915
      %963 = vmatprep.subr.bf16.mxu0 0
      %964 = vmatpush1.bf16.msra.mxu0 %v916
      %965 = vmatprep.mubr.bf16.mxu0 %v797
      %966 = vmatmul.mubr.bf16.gmra.mrb[0].mxu0 %v796
      %v967 = vpop.f32.mrb[0].mxu0
      %v968 = vadd.f32 %v835, %v967
      %v969 = vpop.f32.mrb[0].mxu0
      %v970 = vpop.f32.mrb[0].mxu0
      %v971 = vadd.f32 %v835, %v970
      %v972 = vpop.f32.mrb[0].mxu0
      %973 = vdwg.mxu0
      %v974 = vxor.u32 %v968, 2147483648
      %v975 = vxor.u32 %v971, 2147483648
      %v976 = vmul.f32 %v974, 1.442695
      %v977 = vpow.pop %v976
      %v978 = vmul.f32 %v975, 1.442695
      %v979 = vpow.pop %v978
      %v980 = vadd.f32 %v977, 1.0
      %v981 = vadd.f32 %v979, 1.0
      %v982 = vrcp.pop %v980
      %v983 = vmul.f32 1.0, %v982
      %v984 = vrcp.pop %v981
      %v985 = vmul.f32 1.0, %v984
      %986 = vst [vmem:[%s283] sm:$0xff] %v983
      %987 = vst [vmem:[%s283 + $0x8] sm:$0xff] %v985
      %s988 = smul.u32 2, %s18
      %p989 = scmp.lt.s32.totalorder %s988, 3
      %s990 = scalar_select %p989, %s988, 3
      %s991 = smul.addr %s990, 8
      %s992 = scalar_lea.vmem %s7, %s991
      // Predicated region
      $region49: #{mlp_forward.1} parent=47 // pred_check
        %p993 = pneg %p188
      $region50: #{mlp_forward.1} parent=47 // pred_check_branch
        %995 = sbr.rel (%p993) target = $region52
      $region51: #{mlp_forward.1} parent=47 // pred_region
        %s996 = smul.u32 2, %s18
      $region52: #{mlp_forward.1} parent=47 // pred_fallthru
        _
    $region48: #{mlp_forward.1} parent=5 // pred_fallthru
      _
    %p997 = scmp.le.s32.totalorder 2, %s13
    // Predicated region
    $region53: #{mlp_forward.1} parent=5 // pred_check
      %p998 = pneg %p997
    $region54: #{mlp_forward.1} parent=5 // pred_check_branch
      %1000 = sbr.rel (%p998) target = $region56
    $region55: #{mlp_forward.1} parent=5 // pred_region
      %s1001 = ssub.s32 %s13, 2
      // Predicated region
      $region57: #{mlp_forward.1} parent=55 // pred_check
        %p1002 = pneg %p194
      $region58: #{mlp_forward.1} parent=55 // pred_check_branch
        %1004 = sbr.rel (%p1002) target = $region60
      $region59: #{mlp_forward.1} parent=55 // pred_region
        %s1005 = smul.u32 2, %s19
        %p1006 = scmp.lt.s32.totalorder %s1005, 3
        %s1007 = scalar_select %p1006, %s1005, 3
        %s1008 = smul.addr %s1007, 8
        %s1009 = scalar_lea.vmem %s7, %s1008
      $region60: #{mlp_forward.1} parent=55 // pred_fallthru
        _
    $region56: #{mlp_forward.1} parent=5 // pred_fallthru
      _
  $region6: #{mlp_forward.1} parent=0 // loop_footer
    %s17 = sadd.s32 1, %s13
  $region7: #{mlp_forward.1} parent=0 // loop_footer_branch
    %12 = sbr.rel target = $region3
  $region8: #{mlp_forward.1} parent=0 // loop_exit
    _

</llo_original>
